<compile_context>
chip_gen: v6e
topology: v6e:2x2x1
jax: 0.10.0
libtpu: 0.0.40
codegen_flags: <defaults>
</compile_context>

<pallas_src>
import functools
import math

import jax
import jax.numpy as jnp
from jax.experimental import pallas as pl
from jax.experimental.pallas import tpu as pltpu

_LANE = 128
_SUBLANE = 8


def _round_up(x, m):
    return (x + m - 1) // m * m


def _cdiv(a, b):
    return -(-a // b)


# ---------------------------------------------------------------------------
# Kernels
# ---------------------------------------------------------------------------
def ffn_fused_kernel(x_ref, w1_ref, b1_ref, w2_ref, b2_ref, o_ref):
    """Whole hidden dim resident: o = relu(x@W1 + b1) @ W2 + b2 in one step."""
    h = jnp.dot(x_ref[...], w1_ref[...], preferred_element_type=jnp.float32)
    h = jnp.maximum(h + b1_ref[...], 0.0)                 # bias + ReLU on VPU
    o = jnp.dot(h.astype(w2_ref.dtype), w2_ref[...],
                preferred_element_type=jnp.float32)
    o_ref[...] = (o + b2_ref[...]).astype(o_ref.dtype)


def ffn_reduce_f32out_kernel(x_ref, w1_ref, b1_ref, w2_ref, b2_ref, o_ref):
    """Hidden dim tiled; the f32 output block doubles as the accumulator."""
    j = pl.program_id(1)

    @pl.when(j == 0)
    def _init():
        o_ref[...] = jnp.broadcast_to(b2_ref[...], o_ref.shape)

    h = jnp.dot(x_ref[...], w1_ref[...], preferred_element_type=jnp.float32)
    h = jnp.maximum(h + b1_ref[...], 0.0)
    o_ref[...] += jnp.dot(h.astype(w2_ref.dtype), w2_ref[...],
                          preferred_element_type=jnp.float32)


def ffn_reduce_kernel(x_ref, w1_ref, b1_ref, w2_ref, b2_ref, o_ref, acc_ref):
    """Hidden dim tiled; f32 scratch accumulator for non-f32 output dtypes."""
    j = pl.program_id(1)

    @pl.when(j == 0)
    def _init():
        acc_ref[...] = jnp.zeros_like(acc_ref)

    h = jnp.dot(x_ref[...], w1_ref[...], preferred_element_type=jnp.float32)
    h = jnp.maximum(h + b1_ref[...], 0.0)
    acc_ref[...] += jnp.dot(h.astype(w2_ref.dtype), w2_ref[...],
                            preferred_element_type=jnp.float32)

    @pl.when(j == pl.num_programs(1) - 1)
    def _finalize():
        o_ref[...] = (acc_ref[...] + b2_ref[...]).astype(o_ref.dtype)


# ---------------------------------------------------------------------------
# Hardware / capability queries (cached; never wrap the real pallas_call)
# ---------------------------------------------------------------------------
@functools.lru_cache(maxsize=None)
def _hw_params():
    """(vmem_budget_bytes, num_tensorcores sharing the 'parallel' grid axis)."""
    kind = ""
    try:
        kind = (jax.devices()[0].device_kind or "").lower()
    except Exception:
        pass
    vmem = None
    try:
        vmem = int(pltpu.get_tpu_info().vmem_capacity_bytes)
    except Exception:
        vmem = None
    if not vmem or vmem <= 0:
        vmem = (64 << 20) if ("v7" in kind or "7x" in kind) else (128 << 20)
    budget = (vmem * 13) // 16            # ~52 MiB on v7x, ~104 MiB on v5e/v6e
    num_tc = 2 if any(t in kind for t in ("v7", "7x", "v4", "v5p")) else 1
    return budget, num_tc


@functools.lru_cache(maxsize=None)
def _buffered_block_specs_supported():
    """One-off probe: does this jax lower pipeline_mode=pl.Buffered(1)?"""
    def _copy(x_ref, o_ref):
        o_ref[...] = x_ref[...]

    try:
        x = jnp.zeros((_SUBLANE, _LANE), jnp.float32)
        out = pl.pallas_call(
            _copy,
            out_shape=jax.ShapeDtypeStruct((2 * _SUBLANE, _LANE), jnp.float32),
            grid=(2,),
            in_specs=[pl.BlockSpec((_SUBLANE, _LANE), lambda i: (0, 0),
                                   pipeline_mode=pl.Buffered(1))],
            out_specs=pl.BlockSpec((_SUBLANE, _LANE), lambda i: (i, 0)),
        )(x)
        jax.block_until_ready(out)
        return True
    except Exception:   # capability probe only; the real call is never masked
        return False


# ---------------------------------------------------------------------------
# Tile selection
# ---------------------------------------------------------------------------
def _pick_fused_row_tile(rows, fits, num_tc):
    rows8 = _round_up(rows, _SUBLANE)
    if rows8 <= 1024 and fits(rows8):
        # Whole problem in one row step unless a 2-TC part can split it into
        # two still-substantial halves.
        if num_tc > 1 and rows8 >= 256:
            half = _round_up(_cdiv(rows, 2), _SUBLANE)
            if fits(half):
                return half
        return rows8
    tile = None
    for cand in (1024, 512, 256, 128, 64, 32, 16, 8):
        if cand <= rows8 and fits(cand):
            tile = cand
            break
    if tile is None:
        return None
    steps = _cdiv(rows, tile)
    if num_tc > 1 and steps % num_tc:
        steps = _round_up(steps, num_tc)      # even split across TensorCores
    return max(_SUBLANE, _round_up(_cdiv(rows, steps), _SUBLANE))


def _pick_reduce_tiles(rows, d_hid_p, fits, forced_hid_tile=None):
    rows8 = _round_up(rows, _SUBLANE)
    if forced_hid_tile is not None:
        hid_cands = [forced_hid_tile]
    else:
        hid_cands = [c for c in (2048, 1024, 512, 256, 128) if c <= d_hid_p] or [_LANE]
    rt_cands = sorted(
        {c for c in (1024, 512, 256, 128, 64, 32, 16, 8) if c <= rows8}
        | {min(rows8, 1024)},
        reverse=True)
    # Weight HBM traffic is proportional to the row-step count, so take the
    # largest row tile first, then the widest hidden tile that still fits.
    for rt in rt_cands:
        for ht in hid_cands:
            if fits(rt, ht):
                return rt, ht
    return rt_cands[-1], hid_cands[-1]        # last resort


# ---------------------------------------------------------------------------
# Public wrapper
# ---------------------------------------------------------------------------
def position_wise_ffn(x, w1, b1, w2, b2, *, row_tile=None, hid_tile=None,
                      compute_dtype=None):
    """x: (..., d_in) -> (..., d_out).  Weights (in, out); biases (out,).

    Matches torch `dense2(relu(dense1(x)))` with f32 MXU accumulation.  Pass
    bf16 operands (or compute_dtype=jnp.bfloat16) for the fast production
    path; accumulation stays f32.  Pre-padded (128-aligned) weights skip the
    per-call padding copies entirely.
    """
    d_in, d_hid = w1.shape
    d_out = w2.shape[1]
    assert x.shape[-1] == d_in and w2.shape[0] == d_hid
    assert b1.shape == (d_hid,) and b2.shape == (d_out,)

    dtype = jnp.dtype(compute_dtype) if compute_dtype is not None else jnp.dtype(x.dtype)
    out_dtype = dtype
    itemsize = dtype.itemsize

    lead_shape = x.shape[:-1]
    rows = math.prod(lead_shape) if lead_shape else 1

    d_in_p = _round_up(d_in, _LANE)
    d_out_p = _round_up(d_out, _LANE)
    d_hid_128 = _round_up(d_hid, _LANE)

    vmem_budget, num_tc = _hw_params()
    single_buffer = _buffered_block_specs_supported()
    w_buf = 1 if single_buffer else 2          # buffers held by invariant blocks

    # ---- VMEM footprint models -------------------------------------------
    def fused_bytes(rt):
        # resident weights (+f32 biases) + 2x-buffered X/out tiles + the
        # transient f32 hidden activation (and its narrow cast) for one tile.
        return (w_buf * ((d_in_p * d_hid_128 + d_hid_128 * d_out_p) * itemsize
                         + (d_hid_128 + d_out_p) * 4)
                + 2 * rt * d_in_p * itemsize
                + 2 * rt * d_out_p * itemsize
                + rt * d_hid_128 * (4 + itemsize))

    def reduce_bytes(rt, ht, with_acc):
        return (2 * rt * d_in_p * itemsize
                + 2 * rt * d_out_p * itemsize
                + 2 * (d_in_p * ht + ht * d_out_p) * itemsize
                + 2 * ht * 4 + w_buf * d_out_p * 4
                + rt * ht * (4 + itemsize)
                + (rt * d_out_p * 4 if with_acc else 0))

    # ---- tiling decisions ---------------------------------------------------
    if hid_tile is not None:
        hid_tile_eff = min(max(_LANE, _round_up(hid_tile, _LANE)), d_hid_128)
    elif fused_bytes(_SUBLANE) <= vmem_budget:
        hid_tile_eff = d_hid_128            # weights fully resident, fetched once
    else:
        hid_tile_eff = None                 # decided together with the row tile

    with_acc = jnp.dtype(out_dtype) != jnp.dtype(jnp.float32)

    if row_tile is not None:
        row_tile_eff = max(_SUBLANE, _round_up(row_tile, _SUBLANE))
    elif hid_tile_eff == d_hid_128:
        row_tile_eff = (_pick_fused_row_tile(
            rows, lambda t: fused_bytes(t) <= vmem_budget, num_tc) or _SUBLANE)
    else:
        row_tile_eff, auto_ht = _pick_reduce_tiles(
            rows, d_hid_128,
            lambda r, h: reduce_bytes(r, h, with_acc) <= vmem_budget,
            forced_hid_tile=hid_tile_eff)
        if hid_tile_eff is None:
            hid_tile_eff = auto_ht

    if hid_tile_eff is None:                # row_tile forced, hid tile still open
        hid_tile_eff = next(
            (h for h in (2048, 1024, 512, 256, 128)
             if h <= d_hid_128
             and reduce_bytes(row_tile_eff, h, with_acc) <= vmem_budget),
            _LANE)

    d_hid_p = _round_up(d_hid_128, hid_tile_eff)
    hid_steps = d_hid_p // hid_tile_eff
    row_steps = _cdiv(rows, row_tile_eff)
    rows_p = row_steps * row_tile_eff

    # ---- pad operands (skipped when already aligned; zero padding is exact) --
    def _pad2d(a, r, c):
        pr, pc = r - a.shape[0], c - a.shape[1]
        return a if (pr == 0 and pc == 0) else jnp.pad(a, ((0, pr), (0, pc)))

    x2 = _pad2d(x.reshape(rows, d_in).astype(dtype), rows_p, d_in_p)
    w1_p = _pad2d(w1.astype(dtype), d_in_p, d_hid_p)
    w2_p = _pad2d(w2.astype(dtype), d_hid_p, d_out_p)
    b1_p = _pad2d(b1.astype(jnp.float32).reshape(1, d_hid), 1, d_hid_p)
    b2_p = _pad2d(b2.astype(jnp.float32).reshape(1, d_out), 1, d_out_p)

    # ---- cost / VMEM hints ----------------------------------------------------
    out_itemsize = jnp.dtype(out_dtype).itemsize
    weight_bytes = (w1_p.size + w2_p.size) * itemsize
    weight_fetches = 1 if hid_steps == 1 else row_steps
    bytes_accessed = (x2.size * itemsize
                      + weight_fetches * weight_bytes
                      + (b1_p.size + b2_p.size) * 4
                      + rows_p * d_out_p * out_itemsize)
    flops = 2 * rows_p * d_in_p * d_hid_p + 2 * rows_p * d_hid_p * d_out_p
    cost = pl.CostEstimate(flops=flops, transcendentals=0,
                           bytes_accessed=int(bytes_accessed))
    vmem_limit = int(min(max(vmem_budget, 32 << 20), (128 << 20) - 1))

    def invariant_spec(shape, index_map):
        if single_buffer:
            return pl.BlockSpec(shape, index_map, pipeline_mode=pl.Buffered(1))
        return pl.BlockSpec(shape, index_map)

    # ---- build the pallas_call ------------------------------------------------
    if hid_steps == 1:
        # Fused path: hidden dim fully resident, weights DMA'd exactly once.
        grid = (row_steps,)
        in_specs = [
            pl.BlockSpec((row_tile_eff, d_in_p), lambda i: (i, 0)),
            invariant_spec((d_in_p, d_hid_p), lambda i: (0, 0)),
            invariant_spec((1, d_hid_p), lambda i: (0, 0)),
            invariant_spec((d_hid_p, d_out_p), lambda i: (0, 0)),
            invariant_spec((1, d_out_p), lambda i: (0, 0)),
        ]
        out_specs = pl.BlockSpec((row_tile_eff, d_out_p), lambda i: (i, 0))
        kernel = ffn_fused_kernel
        scratch_shapes = []
        dim_sem = ("parallel",)
    else:
        # Reduction path: hidden dim tiled (trailing "arbitrary" axis).
        grid = (row_steps, hid_steps)
        in_specs = [
            pl.BlockSpec((row_tile_eff, d_in_p), lambda i, j: (i, 0)),
            pl.BlockSpec((d_in_p, hid_tile_eff), lambda i, j: (0, j)),
            pl.BlockSpec((1, hid_tile_eff), lambda i, j: (0, j)),
            pl.BlockSpec((hid_tile_eff, d_out_p), lambda i, j: (j, 0)),
            invariant_spec((1, d_out_p), lambda i, j: (0, 0)),
        ]
        out_specs = pl.BlockSpec((row_tile_eff, d_out_p), lambda i, j: (i, 0))
        if with_acc:
            kernel = ffn_reduce_kernel
            scratch_shapes = [pltpu.VMEM((row_tile_eff, d_out_p), jnp.float32)]
        else:
            kernel = ffn_reduce_f32out_kernel     # accumulate into o_ref directly
            scratch_shapes = []
        dim_sem = ("parallel", "arbitrary")

    out2d = pl.pallas_call(
        kernel,
        out_shape=jax.ShapeDtypeStruct((rows_p, d_out_p), out_dtype),
        grid_spec=pltpu.PrefetchScalarGridSpec(
            num_scalar_prefetch=0,
            grid=grid,
            in_specs=in_specs,
            out_specs=out_specs,
            scratch_shapes=scratch_shapes,
        ),
        compiler_params=pltpu.CompilerParams(
            dimension_semantics=dim_sem,
            vmem_limit_bytes=vmem_limit,
        ),
        cost_estimate=cost,
    )(x2, w1_p, b1_p, w2_p, b2_p)

    if rows_p != rows or d_out_p != d_out:
        out2d = out2d[:rows, :d_out]
    return out2d.reshape(*lead_shape, d_out)


def init_params(key, d_in, d_hid, d_out, dtype=jnp.float32):
    """Deterministic synthetic init (nn.Linear-like uniform)."""
    k1, k2, k3, k4 = jax.random.split(key, 4)
    lim1 = 1.0 / (d_in ** 0.5)
    lim2 = 1.0 / (d_hid ** 0.5)
    w1 = jax.random.uniform(k1, (d_in, d_hid), dtype, -lim1, lim1)
    b1 = jax.random.uniform(k2, (d_hid,), dtype, -lim1, lim1)
    w2 = jax.random.uniform(k3, (d_hid, d_out), dtype, -lim2, lim2)
    b2 = jax.random.uniform(k4, (d_out,), dtype, -lim2, lim2)
    return w1, b1, w2, b2


if __name__ == "__main__":
    # Small shapes consistent with the transformer FFN usage.
    batch, seq = 2, 8
    ffn_num_input, ffn_num_hiddens, ffn_num_outputs = 32, 64, 32

    key = jax.random.PRNGKey(0)
    kx, kp = jax.random.split(key)
    x = jax.random.normal(kx, (batch, seq, ffn_num_input), jnp.float32)
    w1, b1, w2, b2 = init_params(kp, ffn_num_input, ffn_num_hiddens,
                                 ffn_num_outputs)
    ref = jnp.maximum(x @ w1 + b1, 0.0) @ w2 + b2

    # 1) f32, fused single-step path (weights resident, fetched once).
    out = jax.block_until_ready(position_wise_ffn(x, w1, b1, w2, b2))
    assert out.shape == (batch, seq, ffn_num_outputs)
    assert jnp.allclose(out, ref, atol=1e-5, rtol=1e-5)

    # 2) bf16 operands with f32 MXU accumulation (production path), loose check.
    out_bf16 = jax.block_until_ready(position_wise_ffn(
        x.astype(jnp.bfloat16), w1.astype(jnp.bfloat16), b1.astype(jnp.bfloat16),
        w2.astype(jnp.bfloat16), b2.astype(jnp.bfloat16)))
    assert out_bf16.shape == (batch, seq, ffn_num_outputs)
    assert jnp.allclose(out_bf16.astype(jnp.float32), ref, atol=5e-2, rtol=5e-2)

    # 3) Hidden-reduction path (hid_steps > 1), exercising both the
    #    accumulate-into-output (f32) and scratch-accumulator (bf16) kernels.
    d_in2, d_hid2, d_out2 = 32, 256, 64
    k2x, k2p = jax.random.split(jax.random.PRNGKey(1))
    x2 = jax.random.normal(k2x, (batch, seq, d_in2), jnp.float32)
    w1b, b1b, w2b, b2b = init_params(k2p, d_in2, d_hid2, d_out2)
    ref2 = jnp.maximum(x2 @ w1b + b1b, 0.0) @ w2b + b2b

    out2 = jax.block_until_ready(
        position_wise_ffn(x2, w1b, b1b, w2b, b2b, row_tile=8, hid_tile=128))
    assert out2.shape == (batch, seq, d_out2)
    assert jnp.allclose(out2, ref2, atol=1e-4, rtol=1e-4)

    out2_bf16 = jax.block_until_ready(position_wise_ffn(
        x2.astype(jnp.bfloat16), w1b.astype(jnp.bfloat16),
        b1b.astype(jnp.bfloat16), w2b.astype(jnp.bfloat16),
        b2b.astype(jnp.bfloat16), row_tile=8, hid_tile=128))
    assert jnp.allclose(out2_bf16.astype(jnp.float32), ref2, atol=5e-2, rtol=5e-2)

    print("KERNEL_OK")
</pallas_src>

<mosaic_0001>
module attributes {stable_mosaic.version = 11 : i64} {
  func.func @_copy(%arg0: i32, %arg1: memref<8x128xf32, #tpu.memory_space<vmem>>, %arg2: memref<8x128xf32, #tpu.memory_space<vmem>>) attributes {dimension_semantics = [#tpu.dimension_semantics<arbitrary>], iteration_bounds = array<i64: 2>, scalar_prefetch = 0 : i64, scratch_operands = 0 : i64, tpu.core_type = #tpu.core_type<tc>, window_params = [{pipeline_mode = #tpu.pipeline_mode<synchronous>, transform_indices = @transform_0, window_bounds = array<i64: 8, 128>}, {transform_indices = @transform_1, window_bounds = array<i64: 8, 128>}]} {
    %c0 = arith.constant 0 : index
    %c0_0 = arith.constant 0 : index
    %0 = vector.load %arg1[%c0, %c0_0] : memref<8x128xf32, #tpu.memory_space<vmem>>, vector<8x128xf32>
    %c0_1 = arith.constant 0 : index
    %c0_2 = arith.constant 0 : index
    %1 = vector.load %arg2[%c0_1, %c0_2] : memref<8x128xf32, #tpu.memory_space<vmem>>, vector<8x128xf32>
    tpu.vector_store %arg2[%c0_1, %c0_2], %0 {strides = array<i32>} : memref<8x128xf32, #tpu.memory_space<vmem>>, vector<8x128xf32>,
    return
  }
  func.func @transform_0(%arg0: i32) -> (i32, i32) {
    %c0_i32 = arith.constant 0 : i32
    %c0_i32_0 = arith.constant 0 : i32
    %c0_i32_1 = arith.constant 0 : i32
    return %c0_i32, %c0_i32_0 : i32, i32
  }
  func.func @transform_1(%arg0: i32) -> (i32, i32) {
    %c0_i32 = arith.constant 0 : i32
    %c0_i32_0 = arith.constant 0 : i32
    return %arg0, %c0_i32 : i32, i32
  }
}

module attributes {stable_mosaic.version = 11 : i64} {
  func.func @ffn_fused_kernel(%arg0: i32, %arg1: memref<16x128xf32, #tpu.memory_space<vmem>>, %arg2: memref<128x128xf32, #tpu.memory_space<vmem>>, %arg3: memref<1x128xf32, #tpu.memory_space<vmem>>, %arg4: memref<128x128xf32, #tpu.memory_space<vmem>>, %arg5: memref<1x128xf32, #tpu.memory_space<vmem>>, %arg6: memref<16x128xf32, #tpu.memory_space<vmem>>) attributes {dimension_semantics = [#tpu.dimension_semantics<parallel>], iteration_bounds = array<i64: 1>, scalar_prefetch = 0 : i64, scratch_operands = 0 : i64, tpu.core_type = #tpu.core_type<tc>, window_params = [{transform_indices = @transform_0, window_bounds = array<i64: 16, 128>}, {pipeline_mode = #tpu.pipeline_mode<synchronous>, transform_indices = @transform_1, window_bounds = array<i64: 128, 128>}, {pipeline_mode = #tpu.pipeline_mode<synchronous>, transform_indices = @transform_2, window_bounds = array<i64: 1, 128>}, {pipeline_mode = #tpu.pipeline_mode<synchronous>, transform_indices = @transform_3, window_bounds = array<i64: 128, 128>}, {pipeline_mode = #tpu.pipeline_mode<synchronous>, transform_indices = @transform_4, window_bounds = array<i64: 1, 128>}, {transform_indices = @transform_5, window_bounds = array<i64: 16, 128>}]} {
    %c0 = arith.constant 0 : index
    %c0_0 = arith.constant 0 : index
    %0 = vector.load %arg1[%c0, %c0_0] : memref<16x128xf32, #tpu.memory_space<vmem>>, vector<16x128xf32>
    %c0_1 = arith.constant 0 : index
    %c0_2 = arith.constant 0 : index
    %1 = vector.load %arg2[%c0_1, %c0_2] : memref<128x128xf32, #tpu.memory_space<vmem>>, vector<128x128xf32>
    %cst = arith.constant dense<0.000000e+00> : vector<16x128xf32>
    %2 = tpu.matmul %0, %1, %cst {dimension_numbers = #tpu.dot_dimension_numbers<[1], [0], [0], [1], [0, 0, 1, 1], [], []>} : vector<16x128xf32>, vector<128x128xf32>, vector<16x128xf32> -> vector<16x128xf32>
    %c0_3 = arith.constant 0 : index
    %c0_4 = arith.constant 0 : index
    %3 = vector.load %arg3[%c0_3, %c0_4] : memref<1x128xf32, #tpu.memory_space<vmem>>, vector<1x128xf32>
    %4 = vector.broadcast %3 : vector<1x128xf32> to vector<16x128xf32>
    %5 = arith.addf %2, %4 : vector<16x128xf32>
    %cst_5 = arith.constant 0.000000e+00 : f32
    %6 = vector.broadcast %cst_5 : f32 to vector<16x128xf32>
    %7 = arith.maximumf %5, %6 : vector<16x128xf32>
    %c0_6 = arith.constant 0 : index
    %c0_7 = arith.constant 0 : index
    %8 = vector.load %arg4[%c0_6, %c0_7] : memref<128x128xf32, #tpu.memory_space<vmem>>, vector<128x128xf32>
    %cst_8 = arith.constant dense<0.000000e+00> : vector<16x128xf32>
    %9 = tpu.matmul %7, %8, %cst_8 {dimension_numbers = #tpu.dot_dimension_numbers<[1], [0], [0], [1], [0, 0, 1, 1], [], []>} : vector<16x128xf32>, vector<128x128xf32>, vector<16x128xf32> -> vector<16x128xf32>
    %c0_9 = arith.constant 0 : index
    %c0_10 = arith.constant 0 : index
    %10 = vector.load %arg5[%c0_9, %c0_10] : memref<1x128xf32, #tpu.memory_space<vmem>>, vector<1x128xf32>
    %11 = vector.broadcast %10 : vector<1x128xf32> to vector<16x128xf32>
    %12 = arith.addf %9, %11 : vector<16x128xf32>
    %c0_11 = arith.constant 0 : index
    %c0_12 = arith.constant 0 : index
    %13 = vector.load %arg6[%c0_11, %c0_12] : memref<16x128xf32, #tpu.memory_space<vmem>>, vector<16x128xf32>
    tpu.vector_store %arg6[%c0_11, %c0_12], %12 {strides = array<i32>} : memref<16x128xf32, #tpu.memory_space<vmem>>, vector<16x128xf32>,
    return
  }
  func.func @transform_0(%arg0: i32) -> (i32, i32) {
    %c0_i32 = arith.constant 0 : i32
    %c0_i32_0 = arith.constant 0 : i32
    return %arg0, %c0_i32 : i32, i32
  }
  func.func @transform_1(%arg0: i32) -> (i32, i32) {
    %c0_i32 = arith.constant 0 : i32
    %c0_i32_0 = arith.constant 0 : i32
    %c0_i32_1 = arith.constant 0 : i32
    return %c0_i32, %c0_i32_0 : i32, i32
  }
  func.func @transform_2(%arg0: i32) -> (i32, i32) {
    %c0_i32 = arith.constant 0 : i32
    %c0_i32_0 = arith.constant 0 : i32
    %c0_i32_1 = arith.constant 0 : i32
    return %c0_i32, %c0_i32_0 : i32, i32
  }
  func.func @transform_3(%arg0: i32) -> (i32, i32) {
    %c0_i32 = arith.constant 0 : i32
    %c0_i32_0 = arith.constant 0 : i32
    %c0_i32_1 = arith.constant 0 : i32
    return %c0_i32, %c0_i32_0 : i32, i32
  }
  func.func @transform_4(%arg0: i32) -> (i32, i32) {
    %c0_i32 = arith.constant 0 : i32
    %c0_i32_0 = arith.constant 0 : i32
    %c0_i32_1 = arith.constant 0 : i32
    return %c0_i32, %c0_i32_0 : i32, i32
  }
  func.func @transform_5(%arg0: i32) -> (i32, i32) {
    %c0_i32 = arith.constant 0 : i32
    %c0_i32_0 = arith.constant 0 : i32
    return %arg0, %c0_i32 : i32, i32
  }
}

</mosaic_0001>

<llo_original>
// kernel: tpu_custom_call.1
$region0: #{tpu_custom_call.1}
  #allocation0 [shape = 'u32[]', space=smem, size = 0x4, offset = 0x4, fixed_abs, tag = 'smem constant byte address 0x4 - core index']
  #allocation1 [shape = 'u32[144,128]{1,0:T(1,128)}', space=vmem, size = 0x12000, scoped, tag = 'internal scratch']
  %s0 = inlined_call_operand.hbm [shape: f32[8,128], index: 0, kind: input, shape index: {}]
  %s1 = inlined_call_operand.hbm [shape: f32[16,128], index: 1, kind: output, shape index: {}]
  %s2 = sld [smem:[#allocation0]]
  $region41: #{tpu_custom_call.1} parent=0
    _
  %s4 = ssub.s32 1, %s2
  %s5 = scalar_select 0, %s4, %s2
  $region1: #{tpu_custom_call.1} parent=0
    #allocation2 [shape = 'u8[4096]{0}', space=vmem, size = 0x1000, scoped, tag = 'input window, operand 0, single buffered']
    #allocation3 [shape = 's32[2]{0}', space=sflag, size = 0x8, scoped, tag = 'scoped memory for tpu_custom_call.1']
    #allocation4 [shape = 's32[2]{0}', space=sflag, size = 0x8, scoped, tag = 'scoped memory for tpu_custom_call.1']
    #allocation5 [shape = 'u8[8192]{0}', space=vmem, size = 0x2000, scoped, tag = 'output window, operand 0']
    %6 = vsyncpa [#allocation3], 0
    %7 = vsyncpa [#allocation4], 0
    %s8 = scalar_lea.sflag [#allocation4], 1
    %9 = vsyncpa %s8, 0
    loop: start=0, step=1, limit=4
    $region2: #{tpu_custom_call.1} parent=1 // loop_pre_header
      _
    $region3: #{tpu_custom_call.1} parent=1 // loop_header
      %s11 = sphi 0, %s15
      %p12 = scmp.ge.s32.totalorder %s11, 4
      %s19 = sphi 0, %s19
      %s21 = sphi 0, %s19
      %s22 = sphi 0, %s21
      %s36 = sphi 0, %s22
      %s42 = sphi 0, %s44
      %s45 = sphi 0, %s42
      %s46 = sphi 0, %s45
      %s62 = sphi 0, %s46
    $region4: #{tpu_custom_call.1} parent=1 // loop_header_branch
      %14 = sbr.rel (%p12) target = $region8
    $region5: #{tpu_custom_call.1} parent=1 // loop_body
      %s16 = ssub.s32 %s11, 1
      %s17 = ssub.s32 %s11, 2
      %s18 = sadd.s32 %s11, 1
      %s20 = sadd.s32 %s19, 1
      %p23 = scmp.eq.s32.totalorder %s11, 1
      %p24 = scmp.ne.s32.totalorder %s19, %s21
      %p25 = scmp.eq.s32.totalorder %s11, 0
      %p26 = por %p24, %p25
      %p27 = scmp.ne.s32.totalorder %s19, %s21
      %p28 = scmp.eq.s32.totalorder %s16, 1
      %p29 = por %p27, %p28
      %p30 = scmp.ne.s32.totalorder %s21, %s22
      %p31 = scmp.eq.s32.totalorder %s16, 0
      %p32 = por %p30, %p31
      %p33 = scmp.ne.s32.totalorder %s21, %s22
      %p34 = scmp.eq.s32.totalorder %s17, 1
      %p35 = por %p33, %p34
      %p37 = scmp.ne.s32.totalorder %s22, %s36
      %p38 = scmp.eq.s32.totalorder %s17, 0
      %p39 = por %p37, %p38
      %s40 = ssub.s32 %s11, %s18
      %p41 = scmp.eq.s32.totalorder %s40, 0
      %s43 = sadd.s32 %s42, 1
      %s44 = scalar_select %p41, %s42, %s43
      %p47 = pneg %p41
      %p48 = scmp.eq.s32.totalorder %s11, 1
      %p49 = por %p47, %p48
      %p50 = scmp.ne.s32.totalorder %s42, %s45
      %p51 = scmp.eq.s32.totalorder %s11, 0
      %p52 = por %p50, %p51
      %p53 = scmp.ne.s32.totalorder %s42, %s45
      %p54 = scmp.eq.s32.totalorder %s16, 1
      %p55 = por %p53, %p54
      %p56 = scmp.ne.s32.totalorder %s45, %s46
      %p57 = scmp.eq.s32.totalorder %s16, 0
      %p58 = por %p56, %p57
      %p59 = scmp.ne.s32.totalorder %s45, %s46
      %p60 = scmp.eq.s32.totalorder %s17, 1
      %p61 = por %p59, %p60
      %p63 = scmp.ne.s32.totalorder %s46, %s62
      %p64 = scmp.eq.s32.totalorder %s17, 0
      %p65 = por %p63, %p64
      %p66 = scmp.le.s32.totalorder 1, %s11
      %p67 = scmp.lt.s32.totalorder %s11, 3
      %p68 = pnand %p66, %p67
      %p69 = pneg %p68
      // Predicated region
      $region9: #{tpu_custom_call.1} parent=5 // pred_check
        _
      $region10: #{tpu_custom_call.1} parent=5 // pred_check_branch
        %71 = sbr.rel (%p68) target = $region12
      $region11: #{tpu_custom_call.1} parent=5 // pred_region
        %s72 = ssub.s32 %s11, 1
        // Predicated region
        $region13: #{tpu_custom_call.1} parent=11 // pred_check
          %p73 = pneg %p32
        $region14: #{tpu_custom_call.1} parent=11 // pred_check_branch
          %75 = sbr.rel (%p73) target = $region16
        $region15: #{tpu_custom_call.1} parent=11 // pred_region
          %s77 = ssub.s32 128, 128
          %78 = vsyncadd [#allocation3], %s77
          %s80 = sshll.u32 [#allocation2], 4
          %s81 = int_to_ptr.vmem [resolvable:$true] %s80
          %83 = dma.hbm_to_vmem [thread:$0]  %s0, 128, %s81, [#allocation3]
        $region16: #{tpu_custom_call.1} parent=11 // pred_fallthru
          _
      $region12: #{tpu_custom_call.1} parent=5 // pred_fallthru
        _
      %p84 = scmp.lt.s32.totalorder %s11, 2
      // Predicated region
      $region17: #{tpu_custom_call.1} parent=5 // pred_check
        %p85 = pneg %p84
      $region18: #{tpu_custom_call.1} parent=5 // pred_check_branch
        %87 = sbr.rel (%p85) target = $region20
      $region19: #{tpu_custom_call.1} parent=5 // pred_region
        _
      $region20: #{tpu_custom_call.1} parent=5 // pred_fallthru
        _
      %p88 = scmp.le.s32.totalorder 1, %s11
      %p89 = scmp.lt.s32.totalorder %s11, 3
      %p90 = pnand %p88, %p89
      %p91 = pneg %p90
      // Predicated region
      $region21: #{tpu_custom_call.1} parent=5 // pred_check
        _
      $region22: #{tpu_custom_call.1} parent=5 // pred_check_branch
        %93 = sbr.rel (%p90) target = $region24
      $region23: #{tpu_custom_call.1} parent=5 // pred_region
        %s94 = ssub.s32 %s11, 1
        // Predicated region
        $region25: #{tpu_custom_call.1} parent=23 // pred_check
          %p95 = pneg %p32
        $region26: #{tpu_custom_call.1} parent=23 // pred_check_branch
          %97 = sbr.rel (%p95) target = $region28
        $region27: #{tpu_custom_call.1} parent=23 // pred_region
          %98 = dma.done [#allocation3], 128
        $region28: #{tpu_custom_call.1} parent=23 // pred_fallthru
          _
        %p99 = pneg %p32
        %p100 = pneg %p29
        %p101 = pneg %p58
        %p102 = pneg %p55
        %s103 = sand.u32 %s45, 1
        %s104 = scalar_lea.sflag [#allocation4], %s103
        %s105 = sand.u32 %s45, 1
        %s106 = smul.addr %s105, 8
        %s107 = scalar_lea.vmem [#allocation5], %s106
        %v108 = vld [vmem:[#allocation2] sm:$0xff]
        %109 = vst [vmem:[%s107] sm:$0xff] %v108
        %s110 = sand.u32 %s45, 1
        %s111 = scalar_lea.sflag [#allocation4], %s110
        %s112 = sand.u32 %s45, 1
        %s113 = smul.addr %s112, 8
        %s114 = scalar_lea.vmem [#allocation5], %s113
        // Predicated region
        $region29: #{tpu_custom_call.1} parent=23 // pred_check
          %p115 = pneg %p55
        $region30: #{tpu_custom_call.1} parent=23 // pred_check_branch
          %117 = sbr.rel (%p115) target = $region32
        $region31: #{tpu_custom_call.1} parent=23 // pred_region
          %s119 = ssub.s32 128, 128
          %120 = vsyncadd %s111, %s119
          %s121 = smul.addr %s16, 128
          %s122 = scalar_lea.hbm %s1, %s121
          %s124 = sshll.u32 %s114, 4
          %s125 = int_to_ptr.vmem [resolvable:$true] %s124
          %127 = dma.vmem_to_hbm [thread:$0]  %s125, 128, %s122, %s111
        $region32: #{tpu_custom_call.1} parent=23 // pred_fallthru
          _
      $region24: #{tpu_custom_call.1} parent=5 // pred_fallthru
        _
      %p128 = scmp.le.s32.totalorder 2, %s11
      // Predicated region
      $region33: #{tpu_custom_call.1} parent=5 // pred_check
        %p129 = pneg %p128
      $region34: #{tpu_custom_call.1} parent=5 // pred_check_branch
        %131 = sbr.rel (%p129) target = $region36
      $region35: #{tpu_custom_call.1} parent=5 // pred_region
        %s132 = ssub.s32 %s11, 2
        // Predicated region
        $region37: #{tpu_custom_call.1} parent=35 // pred_check
          %p133 = pneg %p61
        $region38: #{tpu_custom_call.1} parent=35 // pred_check_branch
          %135 = sbr.rel (%p133) target = $region40
        $region39: #{tpu_custom_call.1} parent=35 // pred_region
          %s136 = sand.u32 %s46, 1
          %s137 = scalar_lea.sflag [#allocation4], %s136
          %s138 = sand.u32 %s46, 1
          %s139 = smul.addr %s138, 8
          %s140 = scalar_lea.vmem [#allocation5], %s139
          %141 = dma.done %s137, 128
        $region40: #{tpu_custom_call.1} parent=35 // pred_fallthru
          _
      $region36: #{tpu_custom_call.1} parent=5 // pred_fallthru
        _
    $region6: #{tpu_custom_call.1} parent=1 // loop_footer
      %s15 = sadd.s32 1, %s11
    $region7: #{tpu_custom_call.1} parent=1 // loop_footer_branch
      %10 = sbr.rel target = $region3
    $region8: #{tpu_custom_call.1} parent=1 // loop_exit
      _
    %142 = vsyncpa [#allocation3], 1
    %s143 = scalar_lea.sflag [#allocation3], 1
    %144 = vsyncpa %s143, 1
    %145 = vsyncpa [#allocation4], 1
    %s146 = scalar_lea.sflag [#allocation4], 1
    %147 = vsyncpa %s146, 1

// kernel: tpu_custom_call.1
$region0: #{tpu_custom_call.1}
  #allocation0 [shape = 'u32[]', space=smem, size = 0x4, offset = 0x4, fixed_abs, tag = 'smem constant byte address 0x4 - core index']
  #allocation1 [shape = 'u32[144,128]{1,0:T(1,128)}', space=vmem, size = 0x12000, scoped, tag = 'internal scratch']
  %s0 = inlined_call_operand.hbm [shape: f32[16,128], index: 0, kind: input, shape index: {}]
  %s1 = inlined_call_operand.hbm [shape: f32[128,128], index: 1, kind: input, shape index: {}]
  %s2 = inlined_call_operand.vmem [shape: f32[1,128], index: 2, kind: input, shape index: {}]
  %s3 = inlined_call_operand.hbm [shape: f32[128,128], index: 3, kind: input, shape index: {}]
  %s4 = inlined_call_operand.vmem [shape: f32[1,128], index: 4, kind: input, shape index: {}]
  %s5 = inlined_call_operand.hbm [shape: f32[16,128], index: 5, kind: output, shape index: {}]
  %s6 = sld [smem:[#allocation0]]
  $region42: #{tpu_custom_call.1} parent=0
    _
  %s8 = ssub.s32 1, %s6
  %s9 = scalar_select 0, %s8, %s6
  $region1: #{tpu_custom_call.1} parent=0
    #allocation2 [shape = 'u8[8192]{0}', space=vmem, size = 0x2000, scoped, tag = 'input window, operand 0, single buffered']
    #allocation3 [shape = 's32[1]{0}', space=sflag, size = 0x4, scoped, tag = 'scoped memory for tpu_custom_call.1']
    #allocation4 [shape = 's32[1]{0}', space=sflag, size = 0x4, scoped, tag = 'scoped memory for tpu_custom_call.1']
    #allocation5 [shape = 'u8[65536]{0}', space=vmem, size = 0x10000, scoped, tag = 'input window, operand 1, single buffered']
    #allocation6 [shape = 's32[1]{0}', space=sflag, size = 0x4, scoped, tag = 'scoped memory for tpu_custom_call.1']
    #allocation7 [shape = 'u8[65536]{0}', space=vmem, size = 0x10000, scoped, tag = 'input window, operand 3, single buffered']
    #allocation8 [shape = 'u8[8192]{0}', space=vmem, size = 0x2000, scoped, tag = 'output window, operand 0, single buffered']
    %10 = vsyncpa [#allocation3], 0
    %11 = vsyncpa [#allocation6], 0
    %12 = vsyncpa [#allocation4], 0
    // Predicated region
    $region2: #{tpu_custom_call.1} parent=1 // pred_check
      _
    $region3: #{tpu_custom_call.1} parent=1 // pred_check_branch
      %14 = sbr.rel (0) target = $region5
    $region4: #{tpu_custom_call.1} parent=1 // pred_region
      %s16 = ssub.s32 256, 256
      %17 = vsyncadd [#allocation3], %s16
      %s18 = sshll.u32 [#allocation2], 4
      %s19 = int_to_ptr.vmem [resolvable:$true] %s18
      %24 = dma.hbm_to_vmem [thread:$0]  %s0, 256, %s19, [#allocation3], 128, 128, 8
    $region5: #{tpu_custom_call.1} parent=1 // pred_fallthru
      _
    // Predicated region
    $region6: #{tpu_custom_call.1} parent=1 // pred_check
      _
    $region7: #{tpu_custom_call.1} parent=1 // pred_check_branch
      %26 = sbr.rel (0) target = $region9
    $region8: #{tpu_custom_call.1} parent=1 // pred_region
      %s28 = ssub.s32 2048, 2048
      %29 = vsyncadd [#allocation6], %s28
      %s30 = sshll.u32 [#allocation5], 4
      %s31 = int_to_ptr.vmem [resolvable:$true] %s30
      %36 = dma.hbm_to_vmem [thread:$0]  %s1, 2048, %s31, [#allocation6], 128, 128, 8
    $region9: #{tpu_custom_call.1} parent=1 // pred_fallthru
      _
    // Predicated region
    $region10: #{tpu_custom_call.1} parent=1 // pred_check
      _
    $region11: #{tpu_custom_call.1} parent=1 // pred_check_branch
      %38 = sbr.rel (0) target = $region13
    $region12: #{tpu_custom_call.1} parent=1 // pred_region
      _
    $region13: #{tpu_custom_call.1} parent=1 // pred_fallthru
      _
    // Predicated region
    $region14: #{tpu_custom_call.1} parent=1 // pred_check
      _
    $region15: #{tpu_custom_call.1} parent=1 // pred_check_branch
      %40 = sbr.rel (0) target = $region17
    $region16: #{tpu_custom_call.1} parent=1 // pred_region
      %s42 = ssub.s32 2048, 2048
      %43 = vsyncadd [#allocation6], %s42
      %s44 = sshll.u32 [#allocation7], 4
      %s45 = int_to_ptr.vmem [resolvable:$true] %s44
      %50 = dma.hbm_to_vmem [thread:$0]  %s3, 2048, %s45, [#allocation6], 128, 128, 8
    $region17: #{tpu_custom_call.1} parent=1 // pred_fallthru
      _
    // Predicated region
    $region18: #{tpu_custom_call.1} parent=1 // pred_check
      _
    $region19: #{tpu_custom_call.1} parent=1 // pred_check_branch
      %52 = sbr.rel (0) target = $region21
    $region20: #{tpu_custom_call.1} parent=1 // pred_region
      _
    $region21: #{tpu_custom_call.1} parent=1 // pred_fallthru
      _
    // Predicated region
    $region22: #{tpu_custom_call.1} parent=1 // pred_check
      _
    $region23: #{tpu_custom_call.1} parent=1 // pred_check_branch
      %54 = sbr.rel (0) target = $region25
    $region24: #{tpu_custom_call.1} parent=1 // pred_region
      %55 = dma.done [#allocation3], 256
    $region25: #{tpu_custom_call.1} parent=1 // pred_fallthru
      _
    // Predicated region
    $region26: #{tpu_custom_call.1} parent=1 // pred_check
      _
    $region27: #{tpu_custom_call.1} parent=1 // pred_check_branch
      %57 = sbr.rel (0) target = $region29
    $region28: #{tpu_custom_call.1} parent=1 // pred_region
      %58 = dma.done [#allocation6], 2048
    $region29: #{tpu_custom_call.1} parent=1 // pred_fallthru
      _
    // Predicated region
    $region30: #{tpu_custom_call.1} parent=1 // pred_check
      _
    $region31: #{tpu_custom_call.1} parent=1 // pred_check_branch
      %60 = sbr.rel (0) target = $region33
    $region32: #{tpu_custom_call.1} parent=1 // pred_region
      %61 = dma.done [#allocation6], 2048
    $region33: #{tpu_custom_call.1} parent=1 // pred_fallthru
      _
    %v62 = vld [vmem:[#allocation2] sm:$0xff]
    %v63 = vld [vmem:[#allocation2 + $0x8] sm:$0xff]
    %v64 = vld [vmem:[#allocation5] sm:$0xff]
    %v65 = vld [vmem:[#allocation5 + $0x8] sm:$0xff]
    %v66 = vld [vmem:[#allocation5 + $0x10] sm:$0xff]
    %v67 = vld [vmem:[#allocation5 + $0x18] sm:$0xff]
    %v68 = vld [vmem:[#allocation5 + $0x20] sm:$0xff]
    %v69 = vld [vmem:[#allocation5 + $0x28] sm:$0xff]
    %v70 = vld [vmem:[#allocation5 + $0x30] sm:$0xff]
    %v71 = vld [vmem:[#allocation5 + $0x38] sm:$0xff]
    %v72 = vld [vmem:[#allocation5 + $0x40] sm:$0xff]
    %v73 = vld [vmem:[#allocation5 + $0x48] sm:$0xff]
    %v74 = vld [vmem:[#allocation5 + $0x50] sm:$0xff]
    %v75 = vld [vmem:[#allocation5 + $0x58] sm:$0xff]
    %v76 = vld [vmem:[#allocation5 + $0x60] sm:$0xff]
    %v77 = vld [vmem:[#allocation5 + $0x68] sm:$0xff]
    %v78 = vld [vmem:[#allocation5 + $0x70] sm:$0xff]
    %v79 = vld [vmem:[#allocation5 + $0x78] sm:$0xff]
    %v80 = vld [vmem:[%s2] sm:$0x1]
    %v82 = vlaneseq
    %v83 = vshrl.u32 %v82, 7
    %v84 = vsub.s32 0, %v83
    %v85 = vrot.slane %v80, %v84
    %87 = vmatprep.subr.mxu0 0.0
    %88 = vmatpush1.msra.mxu0 %v79
    %89 = vmatprep.subr.mxu0 0.0
    %90 = vmatpush1.msra.mxu0 %v78
    %91 = vmatprep.subr.mxu0 0.0
    %92 = vmatpush1.msra.mxu0 %v77
    %93 = vmatprep.subr.mxu0 0.0
    %94 = vmatpush1.msra.mxu0 %v76
    %95 = vmatprep.subr.mxu0 0.0
    %96 = vmatpush1.msra.mxu0 %v75
    %97 = vmatprep.subr.mxu0 0.0
    %98 = vmatpush1.msra.mxu0 %v74
    %99 = vmatprep.subr.mxu0 0.0
    %100 = vmatpush1.msra.mxu0 %v73
    %101 = vmatprep.subr.mxu0 0.0
    %102 = vmatpush1.msra.mxu0 %v72
    %103 = vmatprep.subr.mxu0 0.0
    %104 = vmatpush1.msra.mxu0 %v71
    %105 = vmatprep.subr.mxu0 0.0
    %106 = vmatpush1.msra.mxu0 %v70
    %107 = vmatprep.subr.mxu0 0.0
    %108 = vmatpush1.msra.mxu0 %v69
    %109 = vmatprep.subr.mxu0 0.0
    %110 = vmatpush1.msra.mxu0 %v68
    %111 = vmatprep.subr.mxu0 0.0
    %112 = vmatpush1.msra.mxu0 %v67
    %113 = vmatprep.subr.mxu0 0.0
    %114 = vmatpush1.msra.mxu0 %v66
    %115 = vmatprep.subr.mxu0 0.0
    %116 = vmatpush1.msra.mxu0 %v65
    %117 = vmatprep.subr.mxu0 0.0
    %118 = vmatpush1.msra.mxu0 %v64
    %119 = vmatprep.subr.mxu0 0.0
    %120 = vmatpush2.msra.mxu0 0.0
    %121 = vmatprep.subr.mxu0 0.0
    %122 = vmatpush2.msra.mxu0 0.0
    %123 = vmatprep.subr.mxu0 0.0
    %124 = vmatpush2.msra.mxu0 0.0
    %125 = vmatprep.subr.mxu0 0.0
    %126 = vmatpush2.msra.mxu0 0.0
    %127 = vmatprep.subr.mxu0 0.0
    %128 = vmatpush2.msra.mxu0 0.0
    %129 = vmatprep.subr.mxu0 0.0
    %130 = vmatpush2.msra.mxu0 0.0
    %131 = vmatprep.subr.mxu0 0.0
    %132 = vmatpush2.msra.mxu0 0.0
    %133 = vmatprep.subr.mxu0 0.0
    %134 = vmatpush2.msra.mxu0 0.0
    %135 = vmatprep.subr.mxu0 0.0
    %136 = vmatpush2.msra.mxu0 0.0
    %137 = vmatprep.subr.mxu0 0.0
    %138 = vmatpush2.msra.mxu0 0.0
    %139 = vmatprep.subr.mxu0 0.0
    %140 = vmatpush2.msra.mxu0 0.0
    %141 = vmatprep.subr.mxu0 0.0
    %142 = vmatpush2.msra.mxu0 0.0
    %143 = vmatprep.subr.mxu0 0.0
    %144 = vmatpush2.msra.mxu0 0.0
    %145 = vmatprep.subr.mxu0 0.0
    %146 = vmatpush2.msra.mxu0 0.0
    %147 = vmatprep.subr.mxu0 0.0
    %148 = vmatpush2.msra.mxu0 0.0
    %149 = vmatprep.subr.mxu0 0.0
    %150 = vmatpush2.msra.mxu0 0.0
    %151 = vmatprep.mubr.f32.mxu0 0.0
    %152 = vmatmul.mubr.f32.gmra.mxu0 %v62
    %v153 = vpop.f32.mrf.mxu0
    %v154 = vadd.f32 %v85, %v153
    %v155 = vpop.f32.mrf.mxu0
    %156 = vmatprep.mubr.f32.mxu0 0.0
    %157 = vmatmul.mubr.f32.gmra.mxu0 %v63
    %v158 = vpop.f32.mrf.mxu0
    %v159 = vadd.f32 %v85, %v158
    %v160 = vpop.f32.mrf.mxu0
    %161 = vdwg.mxu0
    %v162 = vmax.f32 %v154, 0.0
    %v163 = vmax.f32 %v159, 0.0
    %v164 = vld [vmem:[#allocation7] sm:$0xff]
    %v165 = vld [vmem:[#allocation7 + $0x8] sm:$0xff]
    %v166 = vld [vmem:[#allocation7 + $0x10] sm:$0xff]
    %v167 = vld [vmem:[#allocation7 + $0x18] sm:$0xff]
    %v168 = vld [vmem:[#allocation7 + $0x20] sm:$0xff]
    %v169 = vld [vmem:[#allocation7 + $0x28] sm:$0xff]
    %v170 = vld [vmem:[#allocation7 + $0x30] sm:$0xff]
    %v171 = vld [vmem:[#allocation7 + $0x38] sm:$0xff]
    %v172 = vld [vmem:[#allocation7 + $0x40] sm:$0xff]
    %v173 = vld [vmem:[#allocation7 + $0x48] sm:$0xff]
    %v174 = vld [vmem:[#allocation7 + $0x50] sm:$0xff]
    %v175 = vld [vmem:[#allocation7 + $0x58] sm:$0xff]
    %v176 = vld [vmem:[#allocation7 + $0x60] sm:$0xff]
    %v177 = vld [vmem:[#allocation7 + $0x68] sm:$0xff]
    %v178 = vld [vmem:[#allocation7 + $0x70] sm:$0xff]
    %v179 = vld [vmem:[#allocation7 + $0x78] sm:$0xff]
    %v180 = vld [vmem:[%s4] sm:$0x1]
    %v182 = vlaneseq
    %v183 = vshrl.u32 %v182, 7
    %v184 = vsub.s32 0, %v183
    %v185 = vrot.slane %v180, %v184
    %187 = vmatprep.subr.mxu0 0.0
    %188 = vmatpush1.msra.mxu0 %v179
    %189 = vmatprep.subr.mxu0 0.0
    %190 = vmatpush1.msra.mxu0 %v178
    %191 = vmatprep.subr.mxu0 0.0
    %192 = vmatpush1.msra.mxu0 %v177
    %193 = vmatprep.subr.mxu0 0.0
    %194 = vmatpush1.msra.mxu0 %v176
    %195 = vmatprep.subr.mxu0 0.0
    %196 = vmatpush1.msra.mxu0 %v175
    %197 = vmatprep.subr.mxu0 0.0
    %198 = vmatpush1.msra.mxu0 %v174
    %199 = vmatprep.subr.mxu0 0.0
    %200 = vmatpush1.msra.mxu0 %v173
    %201 = vmatprep.subr.mxu0 0.0
    %202 = vmatpush1.msra.mxu0 %v172
    %203 = vmatprep.subr.mxu0 0.0
    %204 = vmatpush1.msra.mxu0 %v171
    %205 = vmatprep.subr.mxu0 0.0
    %206 = vmatpush1.msra.mxu0 %v170
    %207 = vmatprep.subr.mxu0 0.0
    %208 = vmatpush1.msra.mxu0 %v169
    %209 = vmatprep.subr.mxu0 0.0
    %210 = vmatpush1.msra.mxu0 %v168
    %211 = vmatprep.subr.mxu0 0.0
    %212 = vmatpush1.msra.mxu0 %v167
    %213 = vmatprep.subr.mxu0 0.0
    %214 = vmatpush1.msra.mxu0 %v166
    %215 = vmatprep.subr.mxu0 0.0
    %216 = vmatpush1.msra.mxu0 %v165
    %217 = vmatprep.subr.mxu0 0.0
    %218 = vmatpush1.msra.mxu0 %v164
    %219 = vmatprep.subr.mxu0 0.0
    %220 = vmatpush2.msra.mxu0 0.0
    %221 = vmatprep.subr.mxu0 0.0
    %222 = vmatpush2.msra.mxu0 0.0
    %223 = vmatprep.subr.mxu0 0.0
    %224 = vmatpush2.msra.mxu0 0.0
    %225 = vmatprep.subr.mxu0 0.0
    %226 = vmatpush2.msra.mxu0 0.0
    %227 = vmatprep.subr.mxu0 0.0
    %228 = vmatpush2.msra.mxu0 0.0
    %229 = vmatprep.subr.mxu0 0.0
    %230 = vmatpush2.msra.mxu0 0.0
    %231 = vmatprep.subr.mxu0 0.0
    %232 = vmatpush2.msra.mxu0 0.0
    %233 = vmatprep.subr.mxu0 0.0
    %234 = vmatpush2.msra.mxu0 0.0
    %235 = vmatprep.subr.mxu0 0.0
    %236 = vmatpush2.msra.mxu0 0.0
    %237 = vmatprep.subr.mxu0 0.0
    %238 = vmatpush2.msra.mxu0 0.0
    %239 = vmatprep.subr.mxu0 0.0
    %240 = vmatpush2.msra.mxu0 0.0
    %241 = vmatprep.subr.mxu0 0.0
    %242 = vmatpush2.msra.mxu0 0.0
    %243 = vmatprep.subr.mxu0 0.0
    %244 = vmatpush2.msra.mxu0 0.0
    %245 = vmatprep.subr.mxu0 0.0
    %246 = vmatpush2.msra.mxu0 0.0
    %247 = vmatprep.subr.mxu0 0.0
    %248 = vmatpush2.msra.mxu0 0.0
    %249 = vmatprep.subr.mxu0 0.0
    %250 = vmatpush2.msra.mxu0 0.0
    %251 = vmatprep.mubr.f32.mxu0 0.0
    %252 = vmatmul.mubr.f32.gmra.mxu0 %v162
    %v253 = vpop.f32.mrf.mxu0
    %v254 = vadd.f32 %v185, %v253
    %v255 = vpop.f32.mrf.mxu0
    %256 = vmatprep.mubr.f32.mxu0 0.0
    %257 = vmatmul.mubr.f32.gmra.mxu0 %v163
    %v258 = vpop.f32.mrf.mxu0
    %v259 = vadd.f32 %v185, %v258
    %v260 = vpop.f32.mrf.mxu0
    %261 = vdwg.mxu0
    %262 = vst [vmem:[#allocation8] sm:$0xff] %v254
    %263 = vst [vmem:[#allocation8 + $0x8] sm:$0xff] %v259
    // Predicated region
    $region34: #{tpu_custom_call.1} parent=1 // pred_check
      _
    $region35: #{tpu_custom_call.1} parent=1 // pred_check_branch
      %265 = sbr.rel (0) target = $region37
    $region36: #{tpu_custom_call.1} parent=1 // pred_region
      %s267 = ssub.s32 256, 256
      %268 = vsyncadd [#allocation4], %s267
      %s269 = sshll.u32 [#allocation8], 4
      %s270 = int_to_ptr.vmem [resolvable:$true] %s269
      %275 = dma.vmem_to_hbm [thread:$0]  %s270, 256, %s5, [#allocation4], 128, 128, 8
    $region37: #{tpu_custom_call.1} parent=1 // pred_fallthru
      _
    // Predicated region
    $region38: #{tpu_custom_call.1} parent=1 // pred_check
      _
    $region39: #{tpu_custom_call.1} parent=1 // pred_check_branch
      %277 = sbr.rel (0) target = $region41
    $region40: #{tpu_custom_call.1} parent=1 // pred_region
      %278 = dma.done [#allocation4], 256
    $region41: #{tpu_custom_call.1} parent=1 // pred_fallthru
      _
    %279 = vsyncpa [#allocation3], 1
    %280 = vsyncpa [#allocation6], 1
    %281 = vsyncpa [#allocation4], 1

</llo_original>
